<compile_context>
chip_gen: v7x
topology: tpu7x:2x2x1
jax: 0.10.0
libtpu: 0.0.40
codegen_flags: <defaults>
</compile_context>

<pallas_src>
import jax
import jax.numpy as jnp
from jax.experimental import pallas as pl
from jax.experimental.pallas import tpu as pltpu

NUM_QUBITS = 18
LAYERS = 3
TOTAL_PARAMS = NUM_QUBITS * LAYERS  # 54, matches calculate_total_params(18, 3)

LANES = 128  # TPU vreg lane width; pad feature dim to this for dense stores


def _linear_kernel(q_ref, wt_ref, b_ref, o_ref):
    """y = q @ W.T + b with in_features == 1, i.e. scalar * W.T + b (VPU only).

    q_ref  : (1, 1) float32 in SMEM  -- the quantum expectation value (scalar)
    wt_ref : (1, P) float32 in VMEM  -- transposed Linear weight, lane-padded
    b_ref  : (1, P) float32 in VMEM  -- bias, lane-padded
    o_ref  : (1, P) float32 in VMEM  -- output, lane-padded
    """
    q_scalar = q_ref[0, 0]  # scalar load from SMEM, splat on the VPU
    o_ref[...] = q_scalar * wt_ref[...] + b_ref[...]


def ibmq_policy_forward(result_value, weight, bias):
    """Replicates IBMQPolicyNet.forward given the (fallback) quantum result.

    Args:
      result_value: python float / 0-d array, the quantum expectation (0.5 fallback).
      weight: (n_actions, 1) float32, nn.Linear weight.
      bias:   (n_actions,)   float32, nn.Linear bias.
    Returns:
      (1, n_actions) float32 logits.
    """
    n_actions = weight.shape[0]
    n_pad = LANES * pl.cdiv(n_actions, LANES)  # lane-dense width (>= 128)

    # torch.tensor([[result_value]], dtype=torch.float32)
    q_out = jnp.full((1, 1), result_value, dtype=jnp.float32)

    # (n_actions, 1) column vector -> (1, n_actions) row; reshape is
    # layout-identical to the transpose and avoids an extra XLA transpose op.
    w_t = jnp.asarray(weight, dtype=jnp.float32).reshape(1, n_actions)
    b2 = jnp.asarray(bias, dtype=jnp.float32).reshape(1, n_actions)

    # Pad to a full lane width so the kernel's store is unmasked / lane-dense.
    w_pad = jnp.zeros((1, n_pad), dtype=jnp.float32).at[:, :n_actions].set(w_t)
    b_pad = jnp.zeros((1, n_pad), dtype=jnp.float32).at[:, :n_actions].set(b2)

    out_pad = pl.pallas_call(
        _linear_kernel,
        out_shape=jax.ShapeDtypeStruct((1, n_pad), jnp.float32),
        # No grid: single invocation, no pipeline prologue/epilogue.
        in_specs=[
            pl.BlockSpec(memory_space=pltpu.MemorySpace.SMEM),   # scalar q_out
            pl.BlockSpec(memory_space=pltpu.MemorySpace.VMEM),   # W^T (padded)
            pl.BlockSpec(memory_space=pltpu.MemorySpace.VMEM),   # bias (padded)
        ],
        out_specs=pl.BlockSpec(memory_space=pltpu.MemorySpace.VMEM),
    )(q_out, w_pad, b_pad)

    return out_pad[:, :n_actions]


if __name__ == "__main__":
    key = jax.random.PRNGKey(0)
    k_qp, k_w, k_b, k_x = jax.random.split(key, 4)

    n_actions = 4

    # Deterministic parameter init mirroring the module's __init__:
    #   q_params = torch.randn(54)  (unused on the fallback path, kept for fidelity)
    q_params = jax.random.normal(k_qp, (TOTAL_PARAMS,), dtype=jnp.float32)
    #   nn.Linear(1, n_actions): W, b ~ U(-1/sqrt(in_features), +1/sqrt(in_features)), in_features=1
    weight = jax.random.uniform(k_w, (n_actions, 1), dtype=jnp.float32, minval=-1.0, maxval=1.0)
    bias = jax.random.uniform(k_b, (n_actions,), dtype=jnp.float32, minval=-1.0, maxval=1.0)

    # Dummy input x (ignored by forward(), exactly as in the PyTorch module).
    x = jax.random.normal(k_x, (1, 1), dtype=jnp.float32)

    # Fallback quantum result (IBM job path always fails without a token).
    result_value = 0.5

    out = ibmq_policy_forward(result_value, weight, bias)
    out = jax.block_until_ready(out)

    # Reference check in plain JAX: y = q_out @ W.T + b
    q_out_ref = jnp.full((1, 1), result_value, dtype=jnp.float32)
    ref = q_out_ref @ weight.T + bias[None, :]
    assert out.shape == (1, n_actions), out.shape
    assert jnp.allclose(out, ref, atol=1e-6), (out, ref)

    print("KERNEL_OK")
</pallas_src>

<mosaic_0001>
module attributes {stable_mosaic.version = 11 : i64} {
  func.func @_linear_kernel(%arg0: memref<1x1xf32, #tpu.memory_space<smem>>, %arg1: memref<1x128xf32, #tpu.memory_space<vmem>>, %arg2: memref<1x128xf32, #tpu.memory_space<vmem>>, %arg3: memref<1x128xf32, #tpu.memory_space<vmem>>) attributes {dimension_semantics = [], scalar_prefetch = 0 : i64, scratch_operands = 0 : i64, tpu.core_type = #tpu.core_type<tc>} {
    %c0 = arith.constant 0 : index
    %c0_0 = arith.constant 0 : index
    %0 = memref.load %arg0[%c0, %c0_0] : memref<1x1xf32, #tpu.memory_space<smem>>
    %c0_1 = arith.constant 0 : index
    %c0_2 = arith.constant 0 : index
    %1 = vector.load %arg1[%c0_1, %c0_2] : memref<1x128xf32, #tpu.memory_space<vmem>>, vector<1x128xf32>
    %2 = vector.broadcast %0 : f32 to vector<1x128xf32>
    %3 = arith.mulf %2, %1 : vector<1x128xf32>
    %c0_3 = arith.constant 0 : index
    %c0_4 = arith.constant 0 : index
    %4 = vector.load %arg2[%c0_3, %c0_4] : memref<1x128xf32, #tpu.memory_space<vmem>>, vector<1x128xf32>
    %5 = arith.addf %3, %4 : vector<1x128xf32>
    %c0_5 = arith.constant 0 : index
    %c0_6 = arith.constant 0 : index
    %6 = vector.load %arg3[%c0_5, %c0_6] : memref<1x128xf32, #tpu.memory_space<vmem>>, vector<1x128xf32>
    tpu.vector_store %arg3[%c0_5, %c0_6], %5 {strides = array<i32>} : memref<1x128xf32, #tpu.memory_space<vmem>>, vector<1x128xf32>,
    return
  }
}

</mosaic_0001>

<llo_original>
// kernel: tpu_custom_call.1
$region0: #{tpu_custom_call.1}
  #allocation0 [shape = 'u32[]', space=smem, size = 0x4, offset = 0x4, fixed_abs, tag = 'smem constant byte address 0x4 - core index']
  #allocation1 [shape = 'u32[144,128]{1,0:T(1,128)}', space=vmem, size = 0x12000, scoped, tag = 'internal scratch']
  #allocation2 [shape = 'f32[1,1]{1,0:T(1,128)S(6)}', space=smem, size = 0x200, scoped, tag = 'scoped memory for tpu_custom_call.1']
  %s0 = inlined_call_operand.<no memory space> [shape: f32[1,1], index: 0, kind: input, shape index: {}]
  %s1 = inlined_call_operand.vmem [shape: f32[1,128], index: 1, kind: input, shape index: {}]
  %s2 = inlined_call_operand.vmem [shape: f32[1,128], index: 2, kind: input, shape index: {}]
  %s3 = inlined_call_operand.hbm [shape: f32[1,128], index: 3, kind: output, shape index: {}]
  %s4 = sld [smem:[#allocation0]]
  $region22: #{tpu_custom_call.1} parent=0
    _
  %s6 = ssub.s32 1, %s4
  %s7 = scalar_select 0, %s6, %s4
  %8 = sst [smem:[#allocation2]] %s0
  $region1: #{tpu_custom_call.1} parent=0
    #allocation3 [shape = 'u8[512]{0}', space=vmem, size = 0x400, scoped, tag = 'output window, operand 0, single buffered']
    #allocation4 [shape = 's32[1]{0}', space=sflag, size = 0x4, scoped, tag = 'scoped memory for tpu_custom_call.1']
    %9 = vsyncpa [#allocation4], 0
    // Predicated region
    $region2: #{tpu_custom_call.1} parent=1 // pred_check
      _
    $region3: #{tpu_custom_call.1} parent=1 // pred_check_branch
      %11 = sbr.rel (0) target = $region5
    $region4: #{tpu_custom_call.1} parent=1 // pred_region
      _
    $region5: #{tpu_custom_call.1} parent=1 // pred_fallthru
      _
    // Predicated region
    $region6: #{tpu_custom_call.1} parent=1 // pred_check
      _
    $region7: #{tpu_custom_call.1} parent=1 // pred_check_branch
      %13 = sbr.rel (0) target = $region9
    $region8: #{tpu_custom_call.1} parent=1 // pred_region
      _
    $region9: #{tpu_custom_call.1} parent=1 // pred_fallthru
      _
    // Predicated region
    $region10: #{tpu_custom_call.1} parent=1 // pred_check
      _
    $region11: #{tpu_custom_call.1} parent=1 // pred_check_branch
      %15 = sbr.rel (0) target = $region13
    $region12: #{tpu_custom_call.1} parent=1 // pred_region
      _
    $region13: #{tpu_custom_call.1} parent=1 // pred_fallthru
      _
    %s16 = sld [smem:[#allocation2]]
    %v17 = vld [vmem:[%s1] sm:$0x1]
    %v18 = vstv %s16
    %v19 = vmul.f32 %v18, %v17
    %v20 = vld [vmem:[%s2] sm:$0x1]
    %v21 = vadd.f32 %v19, %v20
    %22 = vst [vmem:[#allocation3] sm:$0x1] %v21
    // Predicated region
    $region14: #{tpu_custom_call.1} parent=1 // pred_check
      _
    $region15: #{tpu_custom_call.1} parent=1 // pred_check_branch
      %24 = sbr.rel (0) target = $region17
    $region16: #{tpu_custom_call.1} parent=1 // pred_region
      %s26 = ssub.s32 16, 16
      %27 = vsyncadd [#allocation4], %s26
      %s29 = sshll.u32 [#allocation3], 4
      %s30 = int_to_ptr.vmem [resolvable:$true] %s29
      %32 = dma.vmem_to_hbm [thread:$0]  %s30, 16, %s3, [#allocation4]
    $region17: #{tpu_custom_call.1} parent=1 // pred_fallthru
      _
    // Predicated region
    $region18: #{tpu_custom_call.1} parent=1 // pred_check
      _
    $region19: #{tpu_custom_call.1} parent=1 // pred_check_branch
      %34 = sbr.rel (0) target = $region21
    $region20: #{tpu_custom_call.1} parent=1 // pred_region
      %35 = dma.done [#allocation4], 16
    $region21: #{tpu_custom_call.1} parent=1 // pred_fallthru
      _
    %36 = vsyncpa [#allocation4], 1

</llo_original>
